<compile_context>
chip_gen: v7x
topology: tpu7x:2x2x1
jax: 0.10.0
libtpu: 0.0.40
codegen_flags: <defaults>
</compile_context>

<pallas_src>
import jax
import jax.numpy as jnp
from jax.experimental import pallas as pl
from jax.experimental.pallas import tpu as pltpu


def _round_up(x, m):
    return ((x + m - 1) // m) * m


def _embed_kernel(idx_ref, table_ref, out_ref):
    # idx_ref:   (T_pad,) int32, SMEM (scalar prefetch) -- all flat token ids
    # table_ref: (V, Dp)  f32,   VMEM (full table, constant block index)
    # out_ref:   (tb, Dp) f32,   VMEM output tile for this token block
    blk = pl.program_id(0)
    tb = out_ref.shape[0]
    V = table_ref.shape[0]
    base = blk * tb

    def body(t, carry):
        tok = idx_ref[base + t]
        # Clamp out-of-range ids (PyTorch would raise; we clamp instead).
        tok = jnp.clip(tok, 0, V - 1)
        out_ref[pl.ds(t, 1), :] = table_ref[pl.ds(tok, 1), :]
        return carry

    jax.lax.fori_loop(0, tb, body, 0, unroll=8)


def glyph_embedding(indices, table, *, token_block=256):
    """Pallas equivalent of GlyphEmbedding.forward: table[indices]."""
    B, S = indices.shape
    V, D = table.shape
    T = B * S

    # Lane-dense output: pad embedding dim to a multiple of 128.
    Dp = _round_up(D, 128)

    # Effective token block: large (amortize grid overhead, dense stores) but
    # not larger than the sublane-aligned token count; keep >= 2 grid steps
    # when possible so both v7x TensorCores get work.
    tb = min(token_block, _round_up(T, 8))
    if T > 8 and _round_up(T, tb) // tb < 2:
        tb = _round_up(pl.cdiv(T, 2), 8)
    T_pad = _round_up(T, tb)
    grid = T_pad // tb

    # Flat int32 token ids, padded with 0 (padded rows are sliced off below).
    idx_flat = indices.reshape(T).astype(jnp.int32)
    if T_pad != T:
        idx_flat = jnp.pad(idx_flat, (0, T_pad - T))

    # Column-pad the table so every row load/store is full-lane.
    table_p = table if Dp == D else jnp.pad(table, ((0, 0), (0, Dp - D)))

    # TODO(synk): for vocabularies whose f32 table approaches the v7x 64 MiB/TC
    # VMEM budget, keep the table in HBM (memory_space=pl.ANY) and gather rows
    # with manual make_async_copy instead of a VMEM-resident block.
    out = pl.pallas_call(
        _embed_kernel,
        out_shape=jax.ShapeDtypeStruct((T_pad, Dp), table.dtype),
        grid_spec=pltpu.PrefetchScalarGridSpec(
            num_scalar_prefetch=1,
            grid=(grid,),
            in_specs=[
                pl.BlockSpec((V, Dp), lambda i, idx: (0, 0)),      # full table
            ],
            out_specs=pl.BlockSpec((tb, Dp), lambda i, idx: (i, 0)),
        ),
        compiler_params=pltpu.CompilerParams(
            dimension_semantics=("parallel",),
            vmem_limit_bytes=48 * 1024 * 1024,
        ),
    )(idx_flat, table_p)

    return out[:T, :D].reshape(B, S, D)


if __name__ == "__main__":
    # GlyphEmbedding(vocab_size=32, embedding_dim=64) applied to (2, 8) tokens.
    vocab_size = 32
    embedding_dim = 64
    batch, seq = 2, 8

    key = jax.random.PRNGKey(0)
    k_table, k_idx = jax.random.split(key)

    # nn.Embedding default init: weight ~ N(0, 1)
    table = jax.random.normal(k_table, (vocab_size, embedding_dim), dtype=jnp.float32)
    indices = jax.random.randint(k_idx, (batch, seq), 0, vocab_size, dtype=jnp.int32)

    out = glyph_embedding(indices, table)
    out = jax.block_until_ready(out)

    # Reference: plain gather semantics of nn.Embedding.
    ref = jnp.take(table, indices, axis=0)
    assert out.shape == (batch, seq, embedding_dim)
    assert out.dtype == jnp.float32
    assert jnp.allclose(out, ref, atol=1e-6), "mismatch vs reference gather"

    print("KERNEL_OK")
</pallas_src>

<mosaic_0001>
module attributes {stable_mosaic.version = 11 : i64} {
  func.func @_embed_kernel(%arg0: i32, %arg1: memref<16xi32, #tpu.memory_space<smem>>, %arg2: memref<32x128xf32, #tpu.memory_space<vmem>>, %arg3: memref<8x128xf32, #tpu.memory_space<vmem>>) attributes {dimension_semantics = [#tpu.dimension_semantics<parallel>], iteration_bounds = array<i64: 2>, scalar_prefetch = 1 : i64, scratch_operands = 0 : i64, tpu.core_type = #tpu.core_type<tc>, window_params = [{pipeline_mode = #tpu.pipeline_mode<synchronous>, transform_indices = @transform_0, window_bounds = array<i64: 32, 128>}, {transform_indices = @transform_1, window_bounds = array<i64: 8, 128>}]} {
    %c8_i32 = arith.constant 8 : i32
    %0 = arith.muli %arg0, %c8_i32 : i32
    %c0_i32 = arith.constant 0 : i32
    %1 = arith.addi %0, %c0_i32 : i32
    %2 = arith.index_cast %1 : i32 to index
    %3 = memref.load %arg1[%2] : memref<16xi32, #tpu.memory_space<smem>>
    %c0_i32_0 = arith.constant 0 : i32
    %c31_i32 = arith.constant 31 : i32
    %4 = arith.maxsi %c0_i32_0, %3 : i32
    %5 = arith.minsi %c31_i32, %4 : i32
    %6 = arith.index_cast %5 : i32 to index
    %c0 = arith.constant 0 : index
    %7 = vector.load %arg2[%6, %c0] : memref<32x128xf32, #tpu.memory_space<vmem>>, vector<1x128xf32>
    %8 = arith.index_cast %c0_i32 : i32 to index
    %c0_1 = arith.constant 0 : index
    %9 = vector.load %arg3[%8, %c0_1] : memref<8x128xf32, #tpu.memory_space<vmem>>, vector<1x128xf32>
    tpu.vector_store %arg3[%8, %c0_1], %7 {strides = array<i32>} : memref<8x128xf32, #tpu.memory_space<vmem>>, vector<1x128xf32>,
    %c1_i32 = arith.constant 1 : i32
    %10 = arith.addi %0, %c1_i32 : i32
    %11 = arith.index_cast %10 : i32 to index
    %12 = memref.load %arg1[%11] : memref<16xi32, #tpu.memory_space<smem>>
    %c0_i32_2 = arith.constant 0 : i32
    %c31_i32_3 = arith.constant 31 : i32
    %13 = arith.maxsi %c0_i32_2, %12 : i32
    %14 = arith.minsi %c31_i32_3, %13 : i32
    %15 = arith.index_cast %14 : i32 to index
    %c0_4 = arith.constant 0 : index
    %16 = vector.load %arg2[%15, %c0_4] : memref<32x128xf32, #tpu.memory_space<vmem>>, vector<1x128xf32>
    %17 = arith.index_cast %c1_i32 : i32 to index
    %c0_5 = arith.constant 0 : index
    %18 = vector.load %arg3[%17, %c0_5] : memref<8x128xf32, #tpu.memory_space<vmem>>, vector<1x128xf32>
    tpu.vector_store %arg3[%17, %c0_5], %16 {strides = array<i32>} : memref<8x128xf32, #tpu.memory_space<vmem>>, vector<1x128xf32>,
    %c2_i32 = arith.constant 2 : i32
    %19 = arith.addi %0, %c2_i32 : i32
    %20 = arith.index_cast %19 : i32 to index
    %21 = memref.load %arg1[%20] : memref<16xi32, #tpu.memory_space<smem>>
    %c0_i32_6 = arith.constant 0 : i32
    %c31_i32_7 = arith.constant 31 : i32
    %22 = arith.maxsi %c0_i32_6, %21 : i32
    %23 = arith.minsi %c31_i32_7, %22 : i32
    %24 = arith.index_cast %23 : i32 to index
    %c0_8 = arith.constant 0 : index
    %25 = vector.load %arg2[%24, %c0_8] : memref<32x128xf32, #tpu.memory_space<vmem>>, vector<1x128xf32>
    %26 = arith.index_cast %c2_i32 : i32 to index
    %c0_9 = arith.constant 0 : index
    %27 = vector.load %arg3[%26, %c0_9] : memref<8x128xf32, #tpu.memory_space<vmem>>, vector<1x128xf32>
    tpu.vector_store %arg3[%26, %c0_9], %25 {strides = array<i32>} : memref<8x128xf32, #tpu.memory_space<vmem>>, vector<1x128xf32>,
    %c3_i32 = arith.constant 3 : i32
    %28 = arith.addi %0, %c3_i32 : i32
    %29 = arith.index_cast %28 : i32 to index
    %30 = memref.load %arg1[%29] : memref<16xi32, #tpu.memory_space<smem>>
    %c0_i32_10 = arith.constant 0 : i32
    %c31_i32_11 = arith.constant 31 : i32
    %31 = arith.maxsi %c0_i32_10, %30 : i32
    %32 = arith.minsi %c31_i32_11, %31 : i32
    %33 = arith.index_cast %32 : i32 to index
    %c0_12 = arith.constant 0 : index
    %34 = vector.load %arg2[%33, %c0_12] : memref<32x128xf32, #tpu.memory_space<vmem>>, vector<1x128xf32>
    %35 = arith.index_cast %c3_i32 : i32 to index
    %c0_13 = arith.constant 0 : index
    %36 = vector.load %arg3[%35, %c0_13] : memref<8x128xf32, #tpu.memory_space<vmem>>, vector<1x128xf32>
    tpu.vector_store %arg3[%35, %c0_13], %34 {strides = array<i32>} : memref<8x128xf32, #tpu.memory_space<vmem>>, vector<1x128xf32>,
    %c4_i32 = arith.constant 4 : i32
    %37 = arith.addi %0, %c4_i32 : i32
    %38 = arith.index_cast %37 : i32 to index
    %39 = memref.load %arg1[%38] : memref<16xi32, #tpu.memory_space<smem>>
    %c0_i32_14 = arith.constant 0 : i32
    %c31_i32_15 = arith.constant 31 : i32
    %40 = arith.maxsi %c0_i32_14, %39 : i32
    %41 = arith.minsi %c31_i32_15, %40 : i32
    %42 = arith.index_cast %41 : i32 to index
    %c0_16 = arith.constant 0 : index
    %43 = vector.load %arg2[%42, %c0_16] : memref<32x128xf32, #tpu.memory_space<vmem>>, vector<1x128xf32>
    %44 = arith.index_cast %c4_i32 : i32 to index
    %c0_17 = arith.constant 0 : index
    %45 = vector.load %arg3[%44, %c0_17] : memref<8x128xf32, #tpu.memory_space<vmem>>, vector<1x128xf32>
    tpu.vector_store %arg3[%44, %c0_17], %43 {strides = array<i32>} : memref<8x128xf32, #tpu.memory_space<vmem>>, vector<1x128xf32>,
    %c5_i32 = arith.constant 5 : i32
    %46 = arith.addi %0, %c5_i32 : i32
    %47 = arith.index_cast %46 : i32 to index
    %48 = memref.load %arg1[%47] : memref<16xi32, #tpu.memory_space<smem>>
    %c0_i32_18 = arith.constant 0 : i32
    %c31_i32_19 = arith.constant 31 : i32
    %49 = arith.maxsi %c0_i32_18, %48 : i32
    %50 = arith.minsi %c31_i32_19, %49 : i32
    %51 = arith.index_cast %50 : i32 to index
    %c0_20 = arith.constant 0 : index
    %52 = vector.load %arg2[%51, %c0_20] : memref<32x128xf32, #tpu.memory_space<vmem>>, vector<1x128xf32>
    %53 = arith.index_cast %c5_i32 : i32 to index
    %c0_21 = arith.constant 0 : index
    %54 = vector.load %arg3[%53, %c0_21] : memref<8x128xf32, #tpu.memory_space<vmem>>, vector<1x128xf32>
    tpu.vector_store %arg3[%53, %c0_21], %52 {strides = array<i32>} : memref<8x128xf32, #tpu.memory_space<vmem>>, vector<1x128xf32>,
    %c6_i32 = arith.constant 6 : i32
    %55 = arith.addi %0, %c6_i32 : i32
    %56 = arith.index_cast %55 : i32 to index
    %57 = memref.load %arg1[%56] : memref<16xi32, #tpu.memory_space<smem>>
    %c0_i32_22 = arith.constant 0 : i32
    %c31_i32_23 = arith.constant 31 : i32
    %58 = arith.maxsi %c0_i32_22, %57 : i32
    %59 = arith.minsi %c31_i32_23, %58 : i32
    %60 = arith.index_cast %59 : i32 to index
    %c0_24 = arith.constant 0 : index
    %61 = vector.load %arg2[%60, %c0_24] : memref<32x128xf32, #tpu.memory_space<vmem>>, vector<1x128xf32>
    %62 = arith.index_cast %c6_i32 : i32 to index
    %c0_25 = arith.constant 0 : index
    %63 = vector.load %arg3[%62, %c0_25] : memref<8x128xf32, #tpu.memory_space<vmem>>, vector<1x128xf32>
    tpu.vector_store %arg3[%62, %c0_25], %61 {strides = array<i32>} : memref<8x128xf32, #tpu.memory_space<vmem>>, vector<1x128xf32>,
    %c7_i32 = arith.constant 7 : i32
    %64 = arith.addi %0, %c7_i32 : i32
    %65 = arith.index_cast %64 : i32 to index
    %66 = memref.load %arg1[%65] : memref<16xi32, #tpu.memory_space<smem>>
    %c0_i32_26 = arith.constant 0 : i32
    %c31_i32_27 = arith.constant 31 : i32
    %67 = arith.maxsi %c0_i32_26, %66 : i32
    %68 = arith.minsi %c31_i32_27, %67 : i32
    %69 = arith.index_cast %68 : i32 to index
    %c0_28 = arith.constant 0 : index
    %70 = vector.load %arg2[%69, %c0_28] : memref<32x128xf32, #tpu.memory_space<vmem>>, vector<1x128xf32>
    %71 = arith.index_cast %c7_i32 : i32 to index
    %c0_29 = arith.constant 0 : index
    %72 = vector.load %arg3[%71, %c0_29] : memref<8x128xf32, #tpu.memory_space<vmem>>, vector<1x128xf32>
    tpu.vector_store %arg3[%71, %c0_29], %70 {strides = array<i32>} : memref<8x128xf32, #tpu.memory_space<vmem>>, vector<1x128xf32>,
    %c8_i32_30 = arith.constant 8 : i32
    return
  }
  func.func @transform_0(%arg0: i32, %arg1: memref<16xi32, #tpu.memory_space<smem>>) -> (i32, i32) {
    %c0_i32 = arith.constant 0 : i32
    %c0_i32_0 = arith.constant 0 : i32
    %c0_i32_1 = arith.constant 0 : i32
    return %c0_i32, %c0_i32_0 : i32, i32
  }
  func.func @transform_1(%arg0: i32, %arg1: memref<16xi32, #tpu.memory_space<smem>>) -> (i32, i32) {
    %c0_i32 = arith.constant 0 : i32
    %c0_i32_0 = arith.constant 0 : i32
    return %arg0, %c0_i32 : i32, i32
  }
}

</mosaic_0001>

<llo_original>
// kernel: tpu_custom_call.1
$region0: #{tpu_custom_call.1}
  #allocation0 [shape = 'u32[]', space=smem, size = 0x4, offset = 0x4, fixed_abs, tag = 'smem constant byte address 0x4 - core index']
  #allocation1 [shape = 'u32[144,128]{1,0:T(1,128)}', space=vmem, size = 0x12000, scoped, tag = 'internal scratch']
  #allocation2 [shape = 's32[1]{0}', space=sflag, size = 0x4, scoped, tag = 'scoped memory for tpu_custom_call.1']
  #allocation3 [shape = 'u8[512]{0}', space=smem, size = 0x200, scoped, tag = 'prefetched SMEM operand 0']
  %s0 = inlined_call_operand.hbm [shape: s32[16], index: 0, kind: input, shape index: {}]
  %s1 = inlined_call_operand.hbm [shape: f32[32,128], index: 1, kind: input, shape index: {}]
  %s2 = inlined_call_operand.hbm [shape: f32[16,128], index: 2, kind: output, shape index: {}]
  %s3 = sld [smem:[#allocation0]]
  $region41: #{tpu_custom_call.1} parent=0
    _
  %s5 = ssub.s32 1, %s3
  %s6 = scalar_select 0, %s5, %s3
  %8 = dma.hbm_to_smem %s0, 16, [#allocation3], [#allocation2]
  %9 = dma.done [#allocation2], 16
  %10 = sfence
  $region1: #{tpu_custom_call.1} parent=0
    #allocation4 [shape = 'u8[16384]{0}', space=vmem, size = 0x4000, scoped, tag = 'input window, operand 1, single buffered']
    #allocation5 [shape = 's32[2]{0}', space=sflag, size = 0x8, scoped, tag = 'scoped memory for tpu_custom_call.1']
    #allocation6 [shape = 's32[2]{0}', space=sflag, size = 0x8, scoped, tag = 'scoped memory for tpu_custom_call.1']
    #allocation7 [shape = 'u8[8192]{0}', space=vmem, size = 0x2000, scoped, tag = 'output window, operand 0']
    %11 = vsyncpa [#allocation5], 0
    %12 = vsyncpa [#allocation6], 0
    %s13 = scalar_lea.sflag [#allocation6], 1
    %14 = vsyncpa %s13, 0
    loop: start=0, step=1, limit=4
    $region2: #{tpu_custom_call.1} parent=1 // loop_pre_header
      _
    $region3: #{tpu_custom_call.1} parent=1 // loop_header
      %s16 = sphi 0, %s20
      %p17 = scmp.ge.s32.totalorder %s16, 4
      %s24 = sphi 0, %s24
      %s26 = sphi 0, %s24
      %s27 = sphi 0, %s26
      %s41 = sphi 0, %s27
      %s47 = sphi 0, %s49
      %s50 = sphi 0, %s47
      %s51 = sphi 0, %s50
      %s67 = sphi 0, %s51
    $region4: #{tpu_custom_call.1} parent=1 // loop_header_branch
      %19 = sbr.rel (%p17) target = $region8
    $region5: #{tpu_custom_call.1} parent=1 // loop_body
      %s21 = ssub.s32 %s16, 1
      %s22 = ssub.s32 %s16, 2
      %s23 = sadd.s32 %s16, 1
      %s25 = sadd.s32 %s24, 1
      %p28 = scmp.eq.s32.totalorder %s16, 1
      %p29 = scmp.ne.s32.totalorder %s24, %s26
      %p30 = scmp.eq.s32.totalorder %s16, 0
      %p31 = por %p29, %p30
      %p32 = scmp.ne.s32.totalorder %s24, %s26
      %p33 = scmp.eq.s32.totalorder %s21, 1
      %p34 = por %p32, %p33
      %p35 = scmp.ne.s32.totalorder %s26, %s27
      %p36 = scmp.eq.s32.totalorder %s21, 0
      %p37 = por %p35, %p36
      %p38 = scmp.ne.s32.totalorder %s26, %s27
      %p39 = scmp.eq.s32.totalorder %s22, 1
      %p40 = por %p38, %p39
      %p42 = scmp.ne.s32.totalorder %s27, %s41
      %p43 = scmp.eq.s32.totalorder %s22, 0
      %p44 = por %p42, %p43
      %s45 = ssub.s32 %s16, %s23
      %p46 = scmp.eq.s32.totalorder %s45, 0
      %s48 = sadd.s32 %s47, 1
      %s49 = scalar_select %p46, %s47, %s48
      %p52 = pneg %p46
      %p53 = scmp.eq.s32.totalorder %s16, 1
      %p54 = por %p52, %p53
      %p55 = scmp.ne.s32.totalorder %s47, %s50
      %p56 = scmp.eq.s32.totalorder %s16, 0
      %p57 = por %p55, %p56
      %p58 = scmp.ne.s32.totalorder %s47, %s50
      %p59 = scmp.eq.s32.totalorder %s21, 1
      %p60 = por %p58, %p59
      %p61 = scmp.ne.s32.totalorder %s50, %s51
      %p62 = scmp.eq.s32.totalorder %s21, 0
      %p63 = por %p61, %p62
      %p64 = scmp.ne.s32.totalorder %s50, %s51
      %p65 = scmp.eq.s32.totalorder %s22, 1
      %p66 = por %p64, %p65
      %p68 = scmp.ne.s32.totalorder %s51, %s67
      %p69 = scmp.eq.s32.totalorder %s22, 0
      %p70 = por %p68, %p69
      %p71 = scmp.le.s32.totalorder 1, %s16
      %p72 = scmp.lt.s32.totalorder %s16, 3
      %p73 = pnand %p71, %p72
      %p74 = pneg %p73
      // Predicated region
      $region9: #{tpu_custom_call.1} parent=5 // pred_check
        _
      $region10: #{tpu_custom_call.1} parent=5 // pred_check_branch
        %76 = sbr.rel (%p73) target = $region12
      $region11: #{tpu_custom_call.1} parent=5 // pred_region
        %s77 = ssub.s32 %s16, 1
        // Predicated region
        $region13: #{tpu_custom_call.1} parent=11 // pred_check
          %p78 = pneg %p37
        $region14: #{tpu_custom_call.1} parent=11 // pred_check_branch
          %80 = sbr.rel (%p78) target = $region16
        $region15: #{tpu_custom_call.1} parent=11 // pred_region
          %s82 = ssub.s32 512, 512
          %83 = vsyncadd [#allocation5], %s82
          %s84 = sshll.u32 [#allocation4], 4
          %s85 = int_to_ptr.vmem [resolvable:$true] %s84
          %90 = dma.hbm_to_vmem [thread:$0]  %s1, 512, %s85, [#allocation5], 128, 128, 8
        $region16: #{tpu_custom_call.1} parent=11 // pred_fallthru
          _
      $region12: #{tpu_custom_call.1} parent=5 // pred_fallthru
        _
      %p91 = scmp.lt.s32.totalorder %s16, 2
      // Predicated region
      $region17: #{tpu_custom_call.1} parent=5 // pred_check
        %p92 = pneg %p91
      $region18: #{tpu_custom_call.1} parent=5 // pred_check_branch
        %94 = sbr.rel (%p92) target = $region20
      $region19: #{tpu_custom_call.1} parent=5 // pred_region
        _
      $region20: #{tpu_custom_call.1} parent=5 // pred_fallthru
        _
      %p95 = scmp.le.s32.totalorder 1, %s16
      %p96 = scmp.lt.s32.totalorder %s16, 3
      %p97 = pnand %p95, %p96
      %p98 = pneg %p97
      // Predicated region
      $region21: #{tpu_custom_call.1} parent=5 // pred_check
        _
      $region22: #{tpu_custom_call.1} parent=5 // pred_check_branch
        %100 = sbr.rel (%p97) target = $region24
      $region23: #{tpu_custom_call.1} parent=5 // pred_region
        %s101 = ssub.s32 %s16, 1
        // Predicated region
        $region25: #{tpu_custom_call.1} parent=23 // pred_check
          %p102 = pneg %p37
        $region26: #{tpu_custom_call.1} parent=23 // pred_check_branch
          %104 = sbr.rel (%p102) target = $region28
        $region27: #{tpu_custom_call.1} parent=23 // pred_region
          %105 = dma.done [#allocation5], 512
        $region28: #{tpu_custom_call.1} parent=23 // pred_fallthru
          _
        %p106 = pneg %p37
        %p107 = pneg %p34
        %p108 = pneg %p63
        %p109 = pneg %p60
        %s110 = sand.u32 %s50, 1
        %s111 = scalar_lea.sflag [#allocation6], %s110
        %s112 = sand.u32 %s50, 1
        %s113 = smul.addr %s112, 8
        %s114 = scalar_lea.vmem [#allocation7], %s113
        %s115 = smul.u32 %s21, 8
        %s116 = sld [smem:[#allocation3 + %s115]]
        %p117 = scmp.gt.s32.totalorder %s116, 0
        %s118 = scalar_select %p117, %s116, 0
        %p119 = scmp.lt.s32.totalorder %s118, 31
        %s120 = scalar_select %p119, %s118, 31
        %s121 = scalar_lea.vmem [#allocation4], %s120
        %v122 = vld [vmem:[%s121] sm:$0x1]
        %123 = vst [vmem:[%s114] sm:$0x1] %v122
        %s124 = sadd.s32 %s115, 1
        %s125 = sld [smem:[#allocation3 + %s124]]
        %p126 = scmp.gt.s32.totalorder %s125, 0
        %s127 = scalar_select %p126, %s125, 0
        %p128 = scmp.lt.s32.totalorder %s127, 31
        %s129 = scalar_select %p128, %s127, 31
        %s130 = scalar_lea.vmem [#allocation4], %s129
        %v131 = vld [vmem:[%s130] sm:$0x1]
        %132 = vst [vmem:[%s114 + $0x1] sm:$0x1] %v131
        %s133 = sadd.s32 %s115, 2
        %s134 = sld [smem:[#allocation3 + %s133]]
        %p135 = scmp.gt.s32.totalorder %s134, 0
        %s136 = scalar_select %p135, %s134, 0
        %p137 = scmp.lt.s32.totalorder %s136, 31
        %s138 = scalar_select %p137, %s136, 31
        %s139 = scalar_lea.vmem [#allocation4], %s138
        %v140 = vld [vmem:[%s139] sm:$0x1]
        %141 = vst [vmem:[%s114 + $0x2] sm:$0x1] %v140
        %s142 = sadd.s32 %s115, 3
        %s143 = sld [smem:[#allocation3 + %s142]]
        %p144 = scmp.gt.s32.totalorder %s143, 0
        %s145 = scalar_select %p144, %s143, 0
        %p146 = scmp.lt.s32.totalorder %s145, 31
        %s147 = scalar_select %p146, %s145, 31
        %s148 = scalar_lea.vmem [#allocation4], %s147
        %v149 = vld [vmem:[%s148] sm:$0x1]
        %150 = vst [vmem:[%s114 + $0x3] sm:$0x1] %v149
        %s151 = sadd.s32 %s115, 4
        %s152 = sld [smem:[#allocation3 + %s151]]
        %p153 = scmp.gt.s32.totalorder %s152, 0
        %s154 = scalar_select %p153, %s152, 0
        %p155 = scmp.lt.s32.totalorder %s154, 31
        %s156 = scalar_select %p155, %s154, 31
        %s157 = scalar_lea.vmem [#allocation4], %s156
        %v158 = vld [vmem:[%s157] sm:$0x1]
        %159 = vst [vmem:[%s114 + $0x4] sm:$0x1] %v158
        %s160 = sadd.s32 %s115, 5
        %s161 = sld [smem:[#allocation3 + %s160]]
        %p162 = scmp.gt.s32.totalorder %s161, 0
        %s163 = scalar_select %p162, %s161, 0
        %p164 = scmp.lt.s32.totalorder %s163, 31
        %s165 = scalar_select %p164, %s163, 31
        %s166 = scalar_lea.vmem [#allocation4], %s165
        %v167 = vld [vmem:[%s166] sm:$0x1]
        %168 = vst [vmem:[%s114 + $0x5] sm:$0x1] %v167
        %s169 = sadd.s32 %s115, 6
        %s170 = sld [smem:[#allocation3 + %s169]]
        %p171 = scmp.gt.s32.totalorder %s170, 0
        %s172 = scalar_select %p171, %s170, 0
        %p173 = scmp.lt.s32.totalorder %s172, 31
        %s174 = scalar_select %p173, %s172, 31
        %s175 = scalar_lea.vmem [#allocation4], %s174
        %v176 = vld [vmem:[%s175] sm:$0x1]
        %177 = vst [vmem:[%s114 + $0x6] sm:$0x1] %v176
        %s178 = sadd.s32 %s115, 7
        %s179 = sld [smem:[#allocation3 + %s178]]
        %p180 = scmp.gt.s32.totalorder %s179, 0
        %s181 = scalar_select %p180, %s179, 0
        %p182 = scmp.lt.s32.totalorder %s181, 31
        %s183 = scalar_select %p182, %s181, 31
        %s184 = scalar_lea.vmem [#allocation4], %s183
        %v185 = vld [vmem:[%s184] sm:$0x1]
        %186 = vst [vmem:[%s114 + $0x7] sm:$0x1] %v185
        %s187 = sand.u32 %s50, 1
        %s188 = scalar_lea.sflag [#allocation6], %s187
        %s189 = sand.u32 %s50, 1
        %s190 = smul.addr %s189, 8
        %s191 = scalar_lea.vmem [#allocation7], %s190
        // Predicated region
        $region29: #{tpu_custom_call.1} parent=23 // pred_check
          %p192 = pneg %p60
        $region30: #{tpu_custom_call.1} parent=23 // pred_check_branch
          %194 = sbr.rel (%p192) target = $region32
        $region31: #{tpu_custom_call.1} parent=23 // pred_region
          %s196 = ssub.s32 128, 128
          %197 = vsyncadd %s188, %s196
          %s198 = smul.addr %s21, 128
          %s199 = scalar_lea.hbm %s2, %s198
          %s201 = sshll.u32 %s191, 4
          %s202 = int_to_ptr.vmem [resolvable:$true] %s201
          %204 = dma.vmem_to_hbm [thread:$0]  %s202, 128, %s199, %s188
        $region32: #{tpu_custom_call.1} parent=23 // pred_fallthru
          _
      $region24: #{tpu_custom_call.1} parent=5 // pred_fallthru
        _
      %p205 = scmp.le.s32.totalorder 2, %s16
      // Predicated region
      $region33: #{tpu_custom_call.1} parent=5 // pred_check
        %p206 = pneg %p205
      $region34: #{tpu_custom_call.1} parent=5 // pred_check_branch
        %208 = sbr.rel (%p206) target = $region36
      $region35: #{tpu_custom_call.1} parent=5 // pred_region
        %s209 = ssub.s32 %s16, 2
        // Predicated region
        $region37: #{tpu_custom_call.1} parent=35 // pred_check
          %p210 = pneg %p66
        $region38: #{tpu_custom_call.1} parent=35 // pred_check_branch
          %212 = sbr.rel (%p210) target = $region40
        $region39: #{tpu_custom_call.1} parent=35 // pred_region
          %s213 = sand.u32 %s51, 1
          %s214 = scalar_lea.sflag [#allocation6], %s213
          %s215 = sand.u32 %s51, 1
          %s216 = smul.addr %s215, 8
          %s217 = scalar_lea.vmem [#allocation7], %s216
          %218 = dma.done %s214, 128
        $region40: #{tpu_custom_call.1} parent=35 // pred_fallthru
          _
      $region36: #{tpu_custom_call.1} parent=5 // pred_fallthru
        _
    $region6: #{tpu_custom_call.1} parent=1 // loop_footer
      %s20 = sadd.s32 1, %s16
    $region7: #{tpu_custom_call.1} parent=1 // loop_footer_branch
      %15 = sbr.rel target = $region3
    $region8: #{tpu_custom_call.1} parent=1 // loop_exit
      _
    %219 = vsyncpa [#allocation5], 1
    %s220 = scalar_lea.sflag [#allocation5], 1
    %221 = vsyncpa %s220, 1
    %222 = vsyncpa [#allocation6], 1
    %s223 = scalar_lea.sflag [#allocation6], 1
    %224 = vsyncpa %s223, 1

</llo_original>
